<compile_context>
chip_gen: v7x
topology: tpu7x:2x2x1
jax: 0.10.0
libtpu: 0.0.40
codegen_flags: <defaults>
</compile_context>

<pallas_src>
import jax
import jax.numpy as jnp
from jax.experimental import pallas as pl
from jax.experimental.pallas import tpu as pltpu


def _sigmoid(x):
    # Explicit formula so kernel and reference use the identical expression.
    return 1.0 / (1.0 + jnp.exp(-x))


# ---------------------------------------------------------------------------
# Kernel 1: hoisted input projection   xproj = x @ W_ih^T + (b_ih + b_hh)
# ---------------------------------------------------------------------------
def input_proj_kernel(x_ref, w_ref, b_ref, out_ref):
    # x_ref: (N, D), w_ref: (D, 4H), b_ref: (1, 4H), out_ref: (N, 4H)
    out_ref[...] = (
        jnp.dot(x_ref[...], w_ref[...], preferred_element_type=jnp.float32)
        + b_ref[...]
    ).astype(out_ref.dtype)


def input_projection(x_flat, w_t, b_row):
    N, D = x_flat.shape
    G = w_t.shape[1]  # 4H
    cost = pl.CostEstimate(
        flops=2 * N * D * G,
        transcendentals=0,
        bytes_accessed=4 * (N * D + D * G + G + N * G),
    )
    return pl.pallas_call(
        input_proj_kernel,
        out_shape=jax.ShapeDtypeStruct((N, G), jnp.float32),
        grid=(1,),
        in_specs=[
            pl.BlockSpec((N, D), lambda i: (0, 0)),
            pl.BlockSpec((D, G), lambda i: (0, 0)),
            pl.BlockSpec((1, G), lambda i: (0, 0)),
        ],
        out_specs=pl.BlockSpec((N, G), lambda i: (0, 0)),
        cost_estimate=cost,
        compiler_params=pltpu.CompilerParams(
            dimension_semantics=("arbitrary",)),
    )(x_flat, w_t, b_row)


# ---------------------------------------------------------------------------
# Kernel 2: sequential LSTM recurrence over time (one layer)
# ---------------------------------------------------------------------------
def lstm_recurrence_kernel(xproj_ref, w_hh_ref, out_ref, h_out_ref, c_out_ref):
    # xproj_ref: (T, B, 4H) time-major precomputed input projection (+ biases)
    # w_hh_ref : (H, 4H)    transposed recurrent weights
    # out_ref  : (T, B, H)  hidden state for every timestep (time-major)
    # h_out_ref, c_out_ref: (B, H) final hidden / cell state
    T, B, _ = xproj_ref.shape
    H = h_out_ref.shape[-1]

    # Loop-invariant: load the recurrent weights once, keep them resident.
    w_hh = w_hh_ref[...]

    def step(t, carry):
        h, c = carry
        gates = xproj_ref[t] + jnp.dot(
            h, w_hh, preferred_element_type=jnp.float32)
        i = _sigmoid(gates[:, 0:H])
        f = _sigmoid(gates[:, H:2 * H])
        g = jnp.tanh(gates[:, 2 * H:3 * H])
        o = _sigmoid(gates[:, 3 * H:4 * H])
        c_new = f * c + i * g
        h_new = o * jnp.tanh(c_new)
        out_ref[t] = h_new.astype(out_ref.dtype)
        return (h_new, c_new)

    h0 = jnp.zeros((B, H), jnp.float32)
    c0 = jnp.zeros((B, H), jnp.float32)
    # T is static and short here -> full unroll lets the scheduler overlap the
    # MXU push of step t+1's recurrent matmul with step t's EUP gate math.
    h_fin, c_fin = jax.lax.fori_loop(0, T, step, (h0, c0), unroll=True)

    h_out_ref[...] = h_fin.astype(h_out_ref.dtype)
    c_out_ref[...] = c_fin.astype(c_out_ref.dtype)


def lstm_recurrence(xproj, w_hh_t):
    T, B, G = xproj.shape
    H = w_hh_t.shape[0]
    cost = pl.CostEstimate(
        flops=2 * T * B * H * G + 10 * T * B * H,
        transcendentals=5 * T * B * H,
        bytes_accessed=4 * (T * B * G + H * G + T * B * H + 2 * B * H),
    )
    return pl.pallas_call(
        lstm_recurrence_kernel,
        out_shape=(
            jax.ShapeDtypeStruct((T, B, H), jnp.float32),
            jax.ShapeDtypeStruct((B, H), jnp.float32),
            jax.ShapeDtypeStruct((B, H), jnp.float32),
        ),
        grid=(1,),
        in_specs=[
            pl.BlockSpec((T, B, G), lambda i: (0, 0, 0)),
            pl.BlockSpec((H, G), lambda i: (0, 0)),
        ],
        out_specs=(
            pl.BlockSpec((T, B, H), lambda i: (0, 0, 0)),
            pl.BlockSpec((B, H), lambda i: (0, 0)),
            pl.BlockSpec((B, H), lambda i: (0, 0)),
        ),
        cost_estimate=cost,
        compiler_params=pltpu.CompilerParams(
            dimension_semantics=("arbitrary",)),
    )(xproj, w_hh_t)


# ---------------------------------------------------------------------------
# Encoder forward (dropout -> multi-layer LSTM), eval/inference semantics
# ---------------------------------------------------------------------------
def encoder_forward(x, params, num_layers, hidden_size):
    """x: (B, T, input_size). Returns (output (B,T,H), (h_n, c_n) each (L,B,H))."""
    B, T, _ = x.shape
    H = hidden_size
    # TODO(synk): training-mode dropout (Bernoulli mask via pltpu.prng_random_bits)
    # not implemented; forward reproduces eval/inference semantics (identity).
    inp = jnp.transpose(x, (1, 0, 2))  # time-major (T, B, D)
    h_list, c_list = [], []
    for layer in range(num_layers):
        w_ih = params[f"weight_ih_l{layer}"]             # (4H, D_l)
        w_hh = params[f"weight_hh_l{layer}"]             # (4H, H)
        bias = (params[f"bias_ih_l{layer}"] +
                params[f"bias_hh_l{layer}"])             # (4H,) folded once
        d_l = w_ih.shape[1]
        # 1) hoisted, dense input projection over all timesteps & batch rows
        xproj = input_projection(inp.reshape(T * B, d_l), w_ih.T,
                                 bias.reshape(1, 4 * H))
        # 2) sequential recurrence (the only truly serial part)
        out_seq, h_n, c_n = lstm_recurrence(xproj.reshape(T, B, 4 * H), w_hh.T)
        inp = out_seq                                    # (T, B, H) -> next layer
        h_list.append(h_n)
        c_list.append(c_n)
        # inter-layer LSTM dropout is also identity in eval mode
    output = jnp.transpose(inp, (1, 0, 2))               # back to batch-first
    return output, (jnp.stack(h_list, 0), jnp.stack(c_list, 0))


# ---------------------------------------------------------------------------
# Pure-JAX reference mirroring PyTorch nn.LSTM (batch_first, eval mode)
# ---------------------------------------------------------------------------
def reference_forward(x, params, num_layers, hidden_size):
    B, T, _ = x.shape
    H = hidden_size
    hp = jax.lax.Precision.HIGHEST
    inp = x
    h_list, c_list = [], []
    for layer in range(num_layers):
        w_ih = params[f"weight_ih_l{layer}"]
        w_hh = params[f"weight_hh_l{layer}"]
        b_ih = params[f"bias_ih_l{layer}"]
        b_hh = params[f"bias_hh_l{layer}"]
        h = jnp.zeros((B, H), jnp.float32)
        c = jnp.zeros((B, H), jnp.float32)
        outs = []
        for t in range(T):
            xt = inp[:, t, :]
            gates = (jnp.dot(xt, w_ih.T, precision=hp) + b_ih
                     + jnp.dot(h, w_hh.T, precision=hp) + b_hh)
            i = _sigmoid(gates[:, 0:H])
            f = _sigmoid(gates[:, H:2 * H])
            g = jnp.tanh(gates[:, 2 * H:3 * H])
            o = _sigmoid(gates[:, 3 * H:4 * H])
            c = f * c + i * g
            h = o * jnp.tanh(c)
            outs.append(h)
        inp = jnp.stack(outs, axis=1)          # (B, T, H)
        h_list.append(h)
        c_list.append(c)
    return inp, (jnp.stack(h_list, 0), jnp.stack(c_list, 0))


def init_params(key, input_size, hidden_size, num_layers):
    H = hidden_size
    bound = 1.0 / jnp.sqrt(H)
    params = {}
    for layer in range(num_layers):
        d_in = input_size if layer == 0 else H
        key, k1, k2, k3, k4 = jax.random.split(key, 5)
        params[f"weight_ih_l{layer}"] = jax.random.uniform(
            k1, (4 * H, d_in), jnp.float32, -bound, bound)
        params[f"weight_hh_l{layer}"] = jax.random.uniform(
            k2, (4 * H, H), jnp.float32, -bound, bound)
        params[f"bias_ih_l{layer}"] = jax.random.uniform(
            k3, (4 * H,), jnp.float32, -bound, bound)
        params[f"bias_hh_l{layer}"] = jax.random.uniform(
            k4, (4 * H,), jnp.float32, -bound, bound)
    return params


if __name__ == "__main__":
    INPUT_SIZE, HIDDEN_SIZE, NUM_LAYERS = 16, 32, 2
    B, T = 2, 8

    key = jax.random.PRNGKey(0)
    k_x, k_p = jax.random.split(key)
    x = jax.random.normal(k_x, (B, T, INPUT_SIZE), jnp.float32)
    params = init_params(k_p, INPUT_SIZE, HIDDEN_SIZE, NUM_LAYERS)

    out, (h_n, c_n) = encoder_forward(x, params, NUM_LAYERS, HIDDEN_SIZE)
    out = jax.block_until_ready(out)
    h_n = jax.block_until_ready(h_n)
    c_n = jax.block_until_ready(c_n)

    ref_out, (ref_h, ref_c) = reference_forward(x, params, NUM_LAYERS, HIDDEN_SIZE)

    assert out.shape == (B, T, HIDDEN_SIZE)
    assert h_n.shape == (NUM_LAYERS, B, HIDDEN_SIZE)
    assert c_n.shape == (NUM_LAYERS, B, HIDDEN_SIZE)
    assert jnp.allclose(out, ref_out, atol=2e-5, rtol=2e-5), "output mismatch"
    assert jnp.allclose(h_n, ref_h, atol=2e-5, rtol=2e-5), "h_n mismatch"
    assert jnp.allclose(c_n, ref_c, atol=2e-5, rtol=2e-5), "c_n mismatch"
    print("KERNEL_OK")
</pallas_src>

<mosaic_0001>
module attributes {stable_mosaic.version = 11 : i64} {
  func.func @input_proj_kernel(%arg0: i32, %arg1: memref<16x16xf32, #tpu.memory_space<vmem>>, %arg2: memref<16x128xf32, #tpu.memory_space<vmem>>, %arg3: memref<1x128xf32, #tpu.memory_space<vmem>>, %arg4: memref<16x128xf32, #tpu.memory_space<vmem>>) attributes {dimension_semantics = [#tpu.dimension_semantics<arbitrary>], iteration_bounds = array<i64: 1>, scalar_prefetch = 0 : i64, scratch_operands = 0 : i64, tpu.core_type = #tpu.core_type<tc>, window_params = [{pipeline_mode = #tpu.pipeline_mode<synchronous>, transform_indices = @transform_0, window_bounds = array<i64: 16, 16>}, {pipeline_mode = #tpu.pipeline_mode<synchronous>, transform_indices = @transform_1, window_bounds = array<i64: 16, 128>}, {pipeline_mode = #tpu.pipeline_mode<synchronous>, transform_indices = @transform_2, window_bounds = array<i64: 1, 128>}, {pipeline_mode = #tpu.pipeline_mode<synchronous>, transform_indices = @transform_3, window_bounds = array<i64: 16, 128>}]} {
    %c0 = arith.constant 0 : index
    %c0_0 = arith.constant 0 : index
    %0 = vector.load %arg1[%c0, %c0_0] : memref<16x16xf32, #tpu.memory_space<vmem>>, vector<16x16xf32>
    %c0_1 = arith.constant 0 : index
    %c0_2 = arith.constant 0 : index
    %1 = vector.load %arg2[%c0_1, %c0_2] : memref<16x128xf32, #tpu.memory_space<vmem>>, vector<16x128xf32>
    %cst = arith.constant dense<0.000000e+00> : vector<16x128xf32>
    %2 = tpu.matmul %0, %1, %cst {dimension_numbers = #tpu.dot_dimension_numbers<[1], [0], [0], [1], [0, 0, 1, 1], [], []>} : vector<16x16xf32>, vector<16x128xf32>, vector<16x128xf32> -> vector<16x128xf32>
    %c0_3 = arith.constant 0 : index
    %c0_4 = arith.constant 0 : index
    %3 = vector.load %arg3[%c0_3, %c0_4] : memref<1x128xf32, #tpu.memory_space<vmem>>, vector<1x128xf32>
    %4 = vector.broadcast %3 : vector<1x128xf32> to vector<16x128xf32>
    %5 = arith.addf %2, %4 : vector<16x128xf32>
    %c0_5 = arith.constant 0 : index
    %c0_6 = arith.constant 0 : index
    %6 = vector.load %arg4[%c0_5, %c0_6] : memref<16x128xf32, #tpu.memory_space<vmem>>, vector<16x128xf32>
    tpu.vector_store %arg4[%c0_5, %c0_6], %5 {strides = array<i32>} : memref<16x128xf32, #tpu.memory_space<vmem>>, vector<16x128xf32>,
    return
  }
  func.func @transform_0(%arg0: i32) -> (i32, i32) {
    %c0_i32 = arith.constant 0 : i32
    %c0_i32_0 = arith.constant 0 : i32
    %c0_i32_1 = arith.constant 0 : i32
    return %c0_i32, %c0_i32_0 : i32, i32
  }
  func.func @transform_1(%arg0: i32) -> (i32, i32) {
    %c0_i32 = arith.constant 0 : i32
    %c0_i32_0 = arith.constant 0 : i32
    %c0_i32_1 = arith.constant 0 : i32
    return %c0_i32, %c0_i32_0 : i32, i32
  }
  func.func @transform_2(%arg0: i32) -> (i32, i32) {
    %c0_i32 = arith.constant 0 : i32
    %c0_i32_0 = arith.constant 0 : i32
    %c0_i32_1 = arith.constant 0 : i32
    return %c0_i32, %c0_i32_0 : i32, i32
  }
  func.func @transform_3(%arg0: i32) -> (i32, i32) {
    %c0_i32 = arith.constant 0 : i32
    %c0_i32_0 = arith.constant 0 : i32
    %c0_i32_1 = arith.constant 0 : i32
    return %c0_i32, %c0_i32_0 : i32, i32
  }
}

</mosaic_0001>

<llo_original>
// kernel: tpu_custom_call.1
$region0: #{tpu_custom_call.1}
  #allocation0 [shape = 'u32[]', space=smem, size = 0x4, offset = 0x4, fixed_abs, tag = 'smem constant byte address 0x4 - core index']
  #allocation1 [shape = 'u32[144,128]{1,0:T(1,128)}', space=vmem, size = 0x12000, scoped, tag = 'internal scratch']
  %s0 = inlined_call_operand.hbm [shape: f32[16,16], index: 0, kind: input, shape index: {}]
  %s1 = inlined_call_operand.hbm [shape: f32[16,128], index: 1, kind: input, shape index: {}]
  %s2 = inlined_call_operand.vmem [shape: f32[1,128], index: 2, kind: input, shape index: {}]
  %s3 = inlined_call_operand.hbm [shape: f32[16,128], index: 3, kind: output, shape index: {}]
  %s4 = sld [smem:[#allocation0]]
  $region30: #{tpu_custom_call.1} parent=0
    _
  %s6 = ssub.s32 1, %s4
  %s7 = scalar_select 0, %s6, %s4
  $region1: #{tpu_custom_call.1} parent=0
    #allocation2 [shape = 'u8[8192]{0}', space=vmem, size = 0x2000, scoped, tag = 'input window, operand 0, single buffered']
    #allocation3 [shape = 's32[1]{0}', space=sflag, size = 0x4, scoped, tag = 'scoped memory for tpu_custom_call.1']
    #allocation4 [shape = 's32[1]{0}', space=sflag, size = 0x4, scoped, tag = 'scoped memory for tpu_custom_call.1']
    #allocation5 [shape = 'u8[8192]{0}', space=vmem, size = 0x2000, scoped, tag = 'input window, operand 1, single buffered']
    #allocation6 [shape = 's32[1]{0}', space=sflag, size = 0x4, scoped, tag = 'scoped memory for tpu_custom_call.1']
    #allocation7 [shape = 'u8[8192]{0}', space=vmem, size = 0x2000, scoped, tag = 'output window, operand 0, single buffered']
    %8 = vsyncpa [#allocation3], 0
    %9 = vsyncpa [#allocation6], 0
    %10 = vsyncpa [#allocation4], 0
    // Predicated region
    $region2: #{tpu_custom_call.1} parent=1 // pred_check
      _
    $region3: #{tpu_custom_call.1} parent=1 // pred_check_branch
      %12 = sbr.rel (0) target = $region5
    $region4: #{tpu_custom_call.1} parent=1 // pred_region
      %s14 = ssub.s32 256, 256
      %15 = vsyncadd [#allocation3], %s14
      %s16 = sshll.u32 [#allocation2], 4
      %s17 = int_to_ptr.vmem [resolvable:$true] %s16
      %22 = dma.hbm_to_vmem [thread:$0]  %s0, 256, %s17, [#allocation3], 128, 128, 8
    $region5: #{tpu_custom_call.1} parent=1 // pred_fallthru
      _
    // Predicated region
    $region6: #{tpu_custom_call.1} parent=1 // pred_check
      _
    $region7: #{tpu_custom_call.1} parent=1 // pred_check_branch
      %24 = sbr.rel (0) target = $region9
    $region8: #{tpu_custom_call.1} parent=1 // pred_region
      %s26 = ssub.s32 256, 256
      %27 = vsyncadd [#allocation6], %s26
      %s28 = sshll.u32 [#allocation5], 4
      %s29 = int_to_ptr.vmem [resolvable:$true] %s28
      %34 = dma.hbm_to_vmem [thread:$0]  %s1, 256, %s29, [#allocation6], 128, 128, 8
    $region9: #{tpu_custom_call.1} parent=1 // pred_fallthru
      _
    // Predicated region
    $region10: #{tpu_custom_call.1} parent=1 // pred_check
      _
    $region11: #{tpu_custom_call.1} parent=1 // pred_check_branch
      %36 = sbr.rel (0) target = $region13
    $region12: #{tpu_custom_call.1} parent=1 // pred_region
      _
    $region13: #{tpu_custom_call.1} parent=1 // pred_fallthru
      _
    // Predicated region
    $region14: #{tpu_custom_call.1} parent=1 // pred_check
      _
    $region15: #{tpu_custom_call.1} parent=1 // pred_check_branch
      %38 = sbr.rel (0) target = $region17
    $region16: #{tpu_custom_call.1} parent=1 // pred_region
      %39 = dma.done [#allocation3], 256
    $region17: #{tpu_custom_call.1} parent=1 // pred_fallthru
      _
    // Predicated region
    $region18: #{tpu_custom_call.1} parent=1 // pred_check
      _
    $region19: #{tpu_custom_call.1} parent=1 // pred_check_branch
      %41 = sbr.rel (0) target = $region21
    $region20: #{tpu_custom_call.1} parent=1 // pred_region
      %42 = dma.done [#allocation6], 256
    $region21: #{tpu_custom_call.1} parent=1 // pred_fallthru
      _
    %v43 = vld [vmem:[#allocation2] sm:$0xff]
    %v44 = vld [vmem:[#allocation2 + $0x8] sm:$0xff]
    %v45 = vld [vmem:[#allocation5] sm:$0xff]
    %v46 = vld [vmem:[#allocation5 + $0x8] sm:$0xff]
    %v47 = vld [vmem:[%s2] sm:$0x1]
    %v49 = vlaneseq
    %v50 = vshrl.u32 %v49, 7
    %v51 = vsub.s32 0, %v50
    %v52 = vrot.slane %v47, %v51
    %vm54 = vcmask 130048
    %v56 = vsel %vm54, %v43, 0
    %v59 = vsel %vm54, %v44, 0
    %61 = vmatprep.subr.mxu0 0.0
    %62 = vmatpush1.msra.mxu0 %v45
    %63 = vmatprep.subr.mxu0 0.0
    %64 = vmatpush1.msra.mxu0 %v46
    %65 = vmatprep.subr.mxu0 0.0
    %66 = vmatpush1.msra.mxu0 0.0
    %67 = vmatprep.subr.mxu0 0.0
    %68 = vmatpush1.msra.mxu0 0.0
    %69 = vmatprep.subr.mxu0 0.0
    %70 = vmatpush1.msra.mxu0 0.0
    %71 = vmatprep.subr.mxu0 0.0
    %72 = vmatpush1.msra.mxu0 0.0
    %73 = vmatprep.subr.mxu0 0.0
    %74 = vmatpush1.msra.mxu0 0.0
    %75 = vmatprep.subr.mxu0 0.0
    %76 = vmatpush1.msra.mxu0 0.0
    %77 = vmatprep.subr.mxu0 0.0
    %78 = vmatpush1.msra.mxu0 0.0
    %79 = vmatprep.subr.mxu0 0.0
    %80 = vmatpush1.msra.mxu0 0.0
    %81 = vmatprep.subr.mxu0 0.0
    %82 = vmatpush1.msra.mxu0 0.0
    %83 = vmatprep.subr.mxu0 0.0
    %84 = vmatpush1.msra.mxu0 0.0
    %85 = vmatprep.subr.mxu0 0.0
    %86 = vmatpush1.msra.mxu0 0.0
    %87 = vmatprep.subr.mxu0 0.0
    %88 = vmatpush1.msra.mxu0 0.0
    %89 = vmatprep.subr.mxu0 0.0
    %90 = vmatpush1.msra.mxu0 0.0
    %91 = vmatprep.subr.mxu0 0.0
    %92 = vmatpush1.msra.mxu0 0.0
    %93 = vmatprep.subr.mxu0 0.0
    %94 = vmatpush1.msra.mxu0 0.0
    %95 = vmatprep.subr.mxu0 0.0
    %96 = vmatpush1.msra.mxu0 0.0
    %97 = vmatprep.subr.mxu0 0.0
    %98 = vmatpush1.msra.mxu0 0.0
    %99 = vmatprep.subr.mxu0 0.0
    %100 = vmatpush1.msra.mxu0 0.0
    %101 = vmatprep.subr.mxu0 0.0
    %102 = vmatpush1.msra.mxu0 0.0
    %103 = vmatprep.subr.mxu0 0.0
    %104 = vmatpush1.msra.mxu0 0.0
    %105 = vmatprep.subr.mxu0 0.0
    %106 = vmatpush1.msra.mxu0 0.0
    %107 = vmatprep.subr.mxu0 0.0
    %108 = vmatpush1.msra.mxu0 0.0
    %109 = vmatprep.subr.mxu0 0.0
    %110 = vmatpush1.msra.mxu0 0.0
    %111 = vmatprep.subr.mxu0 0.0
    %112 = vmatpush1.msra.mxu0 0.0
    %113 = vmatprep.subr.mxu0 0.0
    %114 = vmatpush1.msra.mxu0 0.0
    %115 = vmatprep.subr.mxu0 0.0
    %116 = vmatpush1.msra.mxu0 0.0
    %117 = vmatprep.subr.mxu0 0.0
    %118 = vmatpush1.msra.mxu0 0.0
    %119 = vmatprep.subr.mxu0 0.0
    %120 = vmatpush1.msra.mxu0 0.0
    %121 = vmatprep.subr.mxu0 0.0
    %122 = vmatpush1.msra.mxu0 0.0
    %123 = vmatprep.subr.mxu0 0.0
    %124 = vmatpush1.msra.mxu0 0.0
    %125 = vmatprep.mubr.f32.mxu0 0.0
    %126 = vmatmul.mubr.f32.gmra.mrb[0].mxu0 %v56
    %v127 = vpop.f32.mrb[0].mxu0
    %v128 = vadd.f32 %v52, %v127
    %v129 = vpop.f32.mrb[0].mxu0
    %130 = vmatprep.mubr.f32.mxu0 0.0
    %131 = vmatmul.mubr.f32.gmra.mrb[0].mxu0 %v59
    %v132 = vpop.f32.mrb[0].mxu0
    %v133 = vadd.f32 %v52, %v132
    %v134 = vpop.f32.mrb[0].mxu0
    %135 = vdwg.mxu0
    %136 = vst [vmem:[#allocation7] sm:$0xff] %v128
    %137 = vst [vmem:[#allocation7 + $0x8] sm:$0xff] %v133
    // Predicated region
    $region22: #{tpu_custom_call.1} parent=1 // pred_check
      _
    $region23: #{tpu_custom_call.1} parent=1 // pred_check_branch
      %139 = sbr.rel (0) target = $region25
    $region24: #{tpu_custom_call.1} parent=1 // pred_region
      %s141 = ssub.s32 256, 256
      %142 = vsyncadd [#allocation4], %s141
      %s143 = sshll.u32 [#allocation7], 4
      %s144 = int_to_ptr.vmem [resolvable:$true] %s143
      %149 = dma.vmem_to_hbm [thread:$0]  %s144, 256, %s3, [#allocation4], 128, 128, 8
    $region25: #{tpu_custom_call.1} parent=1 // pred_fallthru
      _
    // Predicated region
    $region26: #{tpu_custom_call.1} parent=1 // pred_check
      _
    $region27: #{tpu_custom_call.1} parent=1 // pred_check_branch
      %151 = sbr.rel (0) target = $region29
    $region28: #{tpu_custom_call.1} parent=1 // pred_region
      %152 = dma.done [#allocation4], 256
    $region29: #{tpu_custom_call.1} parent=1 // pred_fallthru
      _
    %153 = vsyncpa [#allocation3], 1
    %154 = vsyncpa [#allocation6], 1
    %155 = vsyncpa [#allocation4], 1

</llo_original>
